<compile_context>
chip_gen: v7x
topology: tpu7x:2x2x1
jax: 0.10.0
libtpu: 0.0.40
codegen_flags: <defaults>
</compile_context>

<pallas_src>
import jax
import jax.numpy as jnp
from jax import lax
from jax.experimental import pallas as pl
from jax.experimental.pallas import tpu as pltpu


def _round_up(x, m):
    return ((x + m - 1) // m) * m


def _embed_kernel(ids_ref, w_ref, out_ref):
    """One grid step: gather TB embedding rows via a one-hot MXU matmul.

    ids_ref : VMEM (1, TB, 1) int32   -- token ids for this block (column vector)
    w_ref   : VMEM (V, D)     float32 -- full embedding table (resident, const index_map)
    out_ref : VMEM (TB, D)    float32 -- output tile for this block
    """
    tb = out_ref.shape[0]
    V = w_ref.shape[0]

    ids_col = ids_ref[0]                                      # (TB, 1) int32
    iota_v = lax.broadcasted_iota(jnp.int32, (tb, V), 1)      # (TB, V)
    one_hot = jnp.where(ids_col == iota_v,                    # lane-broadcast compare
                        jnp.float32(1.0), jnp.float32(0.0)).astype(w_ref.dtype)

    out_ref[...] = jnp.dot(
        one_hot, w_ref[...], preferred_element_type=jnp.float32
    ).astype(out_ref.dtype)


def embedding_lookup(ids, weight, *, token_block=256):
    """Pallas equivalent of nn.Embedding(ids): returns weight[ids] with shape (B, S, D)."""
    B, S = ids.shape
    V, D = weight.shape
    T = B * S

    ids_flat = ids.reshape(T).astype(jnp.int32)

    # Effective token block: sublane-aligned (multiple of 8), no larger than needed.
    tb = min(token_block, _round_up(T, 8))
    num_blocks = pl.cdiv(T, tb)
    T_pad = num_blocks * tb
    if T_pad != T:
        # Padded tokens gather row 0 of the table; they are sliced off below.
        ids_flat = jnp.pad(ids_flat, (0, T_pad - T))

    # (num_blocks, TB, 1): last two block dims equal the array dims -> clean tiling.
    ids_blocks = ids_flat.reshape(num_blocks, tb, 1)

    out_flat = pl.pallas_call(
        _embed_kernel,
        out_shape=jax.ShapeDtypeStruct((T_pad, D), weight.dtype),
        grid=(num_blocks,),
        in_specs=[
            # Per-block column of token ids.
            pl.BlockSpec((1, tb, 1), lambda i: (i, 0, 0)),
            # Full embedding table, constant block index -> stays resident in VMEM.
            pl.BlockSpec((V, D), lambda i: (0, 0)),
        ],
        out_specs=pl.BlockSpec((tb, D), lambda i: (i, 0)),
        compiler_params=pltpu.CompilerParams(
            # Token blocks are independent -> shard across TensorCores on v7x.
            dimension_semantics=("parallel",),
        ),
    )(ids_blocks, weight)

    if T_pad != T:
        out_flat = out_flat[:T]
    return out_flat.reshape(B, S, D)


if __name__ == "__main__":
    # Small shapes consistent with the module's forward:
    #   inputs: (batch_size, seq_length) int ids
    #   output: (batch_size, seq_length, embedding_dim)
    vocab_size = 64
    embedding_dim = 32
    batch = 2
    seq = 8

    key = jax.random.PRNGKey(0)
    k_w, k_ids = jax.random.split(key)

    # Deterministic parameter init matching nn.init.uniform_(a=-0.05, b=0.05).
    weight = jax.random.uniform(
        k_w, (vocab_size, embedding_dim), dtype=jnp.float32, minval=-0.05, maxval=0.05
    )
    ids = jax.random.randint(
        k_ids, (batch, seq), minval=0, maxval=vocab_size, dtype=jnp.int32
    )

    out = embedding_lookup(ids, weight)
    out = jax.block_until_ready(out)

    # Reference check (plain JAX gather).
    ref = weight[ids]
    assert out.shape == (batch, seq, embedding_dim), out.shape
    assert out.dtype == jnp.float32
    assert jnp.allclose(out, ref, atol=1e-6), "mismatch vs reference embedding lookup"

    print("KERNEL_OK")
</pallas_src>

<mosaic_0001>
module attributes {stable_mosaic.version = 11 : i64} {
  func.func @_embed_kernel(%arg0: i32, %arg1: memref<1x16x1xi32, #tpu.memory_space<vmem>>, %arg2: memref<64x32xf32, #tpu.memory_space<vmem>>, %arg3: memref<16x32xf32, #tpu.memory_space<vmem>>) attributes {dimension_semantics = [#tpu.dimension_semantics<parallel>], iteration_bounds = array<i64: 1>, scalar_prefetch = 0 : i64, scratch_operands = 0 : i64, tpu.core_type = #tpu.core_type<tc>, window_params = [{transform_indices = @transform_0, window_bounds = array<i64: 1, 16, 1>}, {pipeline_mode = #tpu.pipeline_mode<synchronous>, transform_indices = @transform_1, window_bounds = array<i64: 64, 32>}, {transform_indices = @transform_2, window_bounds = array<i64: 16, 32>}]} {
    %c0 = arith.constant 0 : index
    %c0_0 = arith.constant 0 : index
    %c0_1 = arith.constant 0 : index
    %0 = vector.load %arg1[%c0, %c0_0, %c0_1] : memref<1x16x1xi32, #tpu.memory_space<vmem>>, vector<1x16x1xi32>
    %1 = vector.shape_cast %0 : vector<1x16x1xi32> to vector<16x1xi32>
    %2 = tpu.iota {dimensions = array<i32: 1>} : vector<16x64xi32>
    %3 = vector.broadcast %1 : vector<16x1xi32> to vector<16x64xi32>
    %4 = arith.cmpi eq, %3, %2 : vector<16x64xi32>
    %cst = arith.constant 1.000000e+00 : f32
    %cst_2 = arith.constant 0.000000e+00 : f32
    %5 = vector.broadcast %cst : f32 to vector<16x64xf32>
    %6 = vector.broadcast %cst_2 : f32 to vector<16x64xf32>
    %7 = arith.select %4, %5, %6 : vector<16x64xi1>, vector<16x64xf32>
    %c0_3 = arith.constant 0 : index
    %c0_4 = arith.constant 0 : index
    %8 = vector.load %arg2[%c0_3, %c0_4] : memref<64x32xf32, #tpu.memory_space<vmem>>, vector<64x32xf32>
    %cst_5 = arith.constant dense<0.000000e+00> : vector<16x32xf32>
    %9 = tpu.matmul %7, %8, %cst_5 {dimension_numbers = #tpu.dot_dimension_numbers<[1], [0], [0], [1], [0, 0, 1, 1], [], []>} : vector<16x64xf32>, vector<64x32xf32>, vector<16x32xf32> -> vector<16x32xf32>
    %c0_6 = arith.constant 0 : index
    %c0_7 = arith.constant 0 : index
    %10 = vector.load %arg3[%c0_6, %c0_7] : memref<16x32xf32, #tpu.memory_space<vmem>>, vector<16x32xf32>
    tpu.vector_store %arg3[%c0_6, %c0_7], %9 {strides = array<i32>} : memref<16x32xf32, #tpu.memory_space<vmem>>, vector<16x32xf32>,
    return
  }
  func.func @transform_0(%arg0: i32) -> (i32, i32, i32) {
    %c0_i32 = arith.constant 0 : i32
    %c0_i32_0 = arith.constant 0 : i32
    %c0_i32_1 = arith.constant 0 : i32
    return %arg0, %c0_i32, %c0_i32_0 : i32, i32, i32
  }
  func.func @transform_1(%arg0: i32) -> (i32, i32) {
    %c0_i32 = arith.constant 0 : i32
    %c0_i32_0 = arith.constant 0 : i32
    %c0_i32_1 = arith.constant 0 : i32
    return %c0_i32, %c0_i32_0 : i32, i32
  }
  func.func @transform_2(%arg0: i32) -> (i32, i32) {
    %c0_i32 = arith.constant 0 : i32
    %c0_i32_0 = arith.constant 0 : i32
    return %arg0, %c0_i32 : i32, i32
  }
}

</mosaic_0001>

<llo_original>
// kernel: tpu_custom_call.1
$region0: #{tpu_custom_call.1}
  #allocation0 [shape = 'u32[]', space=smem, size = 0x4, offset = 0x4, fixed_abs, tag = 'smem constant byte address 0x4 - core index']
  #allocation1 [shape = 'u32[144,128]{1,0:T(1,128)}', space=vmem, size = 0x12000, scoped, tag = 'internal scratch']
  %s0 = inlined_call_operand.vmem [shape: s32[1,16,1], index: 0, kind: input, shape index: {}]
  %s1 = inlined_call_operand.vmem [shape: f32[64,32], index: 1, kind: input, shape index: {}]
  %s2 = inlined_call_operand.hbm [shape: f32[16,32], index: 2, kind: output, shape index: {}]
  %s3 = sld [smem:[#allocation0]]
  $region18: #{tpu_custom_call.1} parent=0
    _
  %s5 = ssub.s32 1, %s3
  %s6 = scalar_select 0, %s5, %s3
  $region1: #{tpu_custom_call.1} parent=0
    #allocation2 [shape = 'u8[8192]{0}', space=vmem, size = 0x2000, scoped, tag = 'output window, operand 0, single buffered']
    #allocation3 [shape = 's32[1]{0}', space=sflag, size = 0x4, scoped, tag = 'scoped memory for tpu_custom_call.1']
    %7 = vsyncpa [#allocation3], 0
    // Predicated region
    $region2: #{tpu_custom_call.1} parent=1 // pred_check
      _
    $region3: #{tpu_custom_call.1} parent=1 // pred_check_branch
      %9 = sbr.rel (0) target = $region5
    $region4: #{tpu_custom_call.1} parent=1 // pred_region
      _
    $region5: #{tpu_custom_call.1} parent=1 // pred_fallthru
      _
    // Predicated region
    $region6: #{tpu_custom_call.1} parent=1 // pred_check
      _
    $region7: #{tpu_custom_call.1} parent=1 // pred_check_branch
      %11 = sbr.rel (0) target = $region9
    $region8: #{tpu_custom_call.1} parent=1 // pred_region
      _
    $region9: #{tpu_custom_call.1} parent=1 // pred_fallthru
      _
    %v12 = vld [vmem:[%s0] sm:$0xff]
    %v13 = vld [vmem:[%s0 + $0x8] sm:$0xff]
    %v14 = vlaneseq
    %v15 = vand.u32 %v14, 127
    %16 = vset.pattern.permute.xlu0 0
    %17 = vperm.xlu0 %16, %v12
    %v18 = vpop.permute.xlu0 %17
    %19 = vset.pattern.permute.xlu0 0
    %20 = vperm.xlu0 %19, %v13
    %v21 = vpop.permute.xlu0 %20
    %vm22 = vcmp.eq.s32.totalorder %v18, %v15
    %vm23 = vcmp.eq.s32.totalorder %v21, %v15
    %v24 = vsel %vm22, 1.0, 0.0
    %v25 = vsel %vm23, 1.0, 0.0
    %v26 = vld [vmem:[%s1] sm:$0xff]
    %v27 = vld [vmem:[%s1 + $0x8] sm:$0xff]
    %v28 = vld [vmem:[%s1 + $0x10] sm:$0xff]
    %v29 = vld [vmem:[%s1 + $0x18] sm:$0xff]
    %v30 = vld [vmem:[%s1 + $0x20] sm:$0xff]
    %v31 = vld [vmem:[%s1 + $0x28] sm:$0xff]
    %v32 = vld [vmem:[%s1 + $0x30] sm:$0xff]
    %v33 = vld [vmem:[%s1 + $0x38] sm:$0xff]
    %vm34 = vcmask 523264
    %v36 = vsel %vm34, %v24, 0
    %v39 = vsel %vm34, %v25, 0
    %41 = vmatprep.subr.mxu0 0.0
    %42 = vmatpush1.msra.mxu0 %v26
    %43 = vmatprep.subr.mxu0 0.0
    %44 = vmatpush1.msra.mxu0 %v27
    %45 = vmatprep.subr.mxu0 0.0
    %46 = vmatpush1.msra.mxu0 %v28
    %47 = vmatprep.subr.mxu0 0.0
    %48 = vmatpush1.msra.mxu0 %v29
    %49 = vmatprep.subr.mxu0 0.0
    %50 = vmatpush1.msra.mxu0 %v30
    %51 = vmatprep.subr.mxu0 0.0
    %52 = vmatpush1.msra.mxu0 %v31
    %53 = vmatprep.subr.mxu0 0.0
    %54 = vmatpush1.msra.mxu0 %v32
    %55 = vmatprep.subr.mxu0 0.0
    %56 = vmatpush1.msra.mxu0 %v33
    %57 = vmatprep.subr.mxu0 0.0
    %58 = vmatpush1.msra.mxu0 0.0
    %59 = vmatprep.subr.mxu0 0.0
    %60 = vmatpush1.msra.mxu0 0.0
    %61 = vmatprep.subr.mxu0 0.0
    %62 = vmatpush1.msra.mxu0 0.0
    %63 = vmatprep.subr.mxu0 0.0
    %64 = vmatpush1.msra.mxu0 0.0
    %65 = vmatprep.subr.mxu0 0.0
    %66 = vmatpush1.msra.mxu0 0.0
    %67 = vmatprep.subr.mxu0 0.0
    %68 = vmatpush1.msra.mxu0 0.0
    %69 = vmatprep.subr.mxu0 0.0
    %70 = vmatpush1.msra.mxu0 0.0
    %71 = vmatprep.subr.mxu0 0.0
    %72 = vmatpush1.msra.mxu0 0.0
    %73 = vmatprep.subr.mxu0 0.0
    %74 = vmatpush1.msra.mxu0 0.0
    %75 = vmatprep.subr.mxu0 0.0
    %76 = vmatpush1.msra.mxu0 0.0
    %77 = vmatprep.subr.mxu0 0.0
    %78 = vmatpush1.msra.mxu0 0.0
    %79 = vmatprep.subr.mxu0 0.0
    %80 = vmatpush1.msra.mxu0 0.0
    %81 = vmatprep.subr.mxu0 0.0
    %82 = vmatpush1.msra.mxu0 0.0
    %83 = vmatprep.subr.mxu0 0.0
    %84 = vmatpush1.msra.mxu0 0.0
    %85 = vmatprep.subr.mxu0 0.0
    %86 = vmatpush1.msra.mxu0 0.0
    %87 = vmatprep.subr.mxu0 0.0
    %88 = vmatpush1.msra.mxu0 0.0
    %89 = vmatprep.subr.mxu0 0.0
    %90 = vmatpush1.msra.mxu0 0.0
    %91 = vmatprep.subr.mxu0 0.0
    %92 = vmatpush1.msra.mxu0 0.0
    %93 = vmatprep.subr.mxu0 0.0
    %94 = vmatpush1.msra.mxu0 0.0
    %95 = vmatprep.subr.mxu0 0.0
    %96 = vmatpush1.msra.mxu0 0.0
    %97 = vmatprep.subr.mxu0 0.0
    %98 = vmatpush1.msra.mxu0 0.0
    %99 = vmatprep.subr.mxu0 0.0
    %100 = vmatpush1.msra.mxu0 0.0
    %101 = vmatprep.subr.mxu0 0.0
    %102 = vmatpush1.msra.mxu0 0.0
    %103 = vmatprep.subr.mxu0 0.0
    %104 = vmatpush1.msra.mxu0 0.0
    %105 = vmatprep.mubr.f32.mxu0 0.0
    %106 = vmatmul.mubr.f32.gmra.mrb[0].mxu0 %v36
    %v107 = vpop.f32.mrb[0].mxu0
    %v108 = vadd.f32 0.0, %v107
    %v109 = vpop.f32.mrb[0].mxu0
    %110 = vmatprep.mubr.f32.mxu0 0.0
    %111 = vmatmul.mubr.f32.gmra.mrb[0].mxu0 %v39
    %v112 = vpop.f32.mrb[0].mxu0
    %v113 = vadd.f32 0.0, %v112
    %v114 = vpop.f32.mrb[0].mxu0
    %115 = vdwg.mxu0
    %vm116 = vcmask 261120
    %117 = vst.msk [vmem:[#allocation2] sm:$0xff] %vm116, %v108
    %118 = vst.msk [vmem:[#allocation2 + $0x8] sm:$0xff] %vm116, %v113
    // Predicated region
    $region10: #{tpu_custom_call.1} parent=1 // pred_check
      _
    $region11: #{tpu_custom_call.1} parent=1 // pred_check_branch
      %120 = sbr.rel (0) target = $region13
    $region12: #{tpu_custom_call.1} parent=1 // pred_region
      %s122 = ssub.s32 256, 256
      %123 = vsyncadd [#allocation3], %s122
      %s124 = sshll.u32 [#allocation2], 4
      %s125 = int_to_ptr.vmem [resolvable:$true] %s124
      %130 = dma.vmem_to_hbm [thread:$0]  %s125, 256, %s2, [#allocation3], 128, 128, 8
    $region13: #{tpu_custom_call.1} parent=1 // pred_fallthru
      _
    // Predicated region
    $region14: #{tpu_custom_call.1} parent=1 // pred_check
      _
    $region15: #{tpu_custom_call.1} parent=1 // pred_check_branch
      %132 = sbr.rel (0) target = $region17
    $region16: #{tpu_custom_call.1} parent=1 // pred_region
      %133 = dma.done [#allocation3], 256
    $region17: #{tpu_custom_call.1} parent=1 // pred_fallthru
      _
    %134 = vsyncpa [#allocation3], 1

</llo_original>
